<compile_context>
chip_gen: v7x
topology: tpu7x:2x2x1
jax: 0.10.0
libtpu: 0.0.40
codegen_flags: <defaults>
</compile_context>

<pallas_src>
import math

import jax
import jax.numpy as jnp
from jax.experimental import pallas as pl
from jax.experimental.pallas import tpu as pltpu


LANE = 128          # TPU lane width: hidden feature dims are zero-padded to this
TM_DEFAULT = 2048   # batch-tile rows (multiple of 16 -> bf16 sublane friendly)


def _round_up(n, m):
    return ((n + m - 1) // m) * m


# ---------------------------------------------------------------------------
# Pallas kernel: one batch tile of Linear -> ReLU -> Linear -> ReLU -> Linear
# ---------------------------------------------------------------------------
def mlp_kernel(x_ref, w1_ref, b1_ref, w2_ref, b2_ref, w3_ref, b3_ref, o_ref):
    # x arrives in its native dtype (f32); cast to the bf16 compute dtype in
    # VMEM right before the MXU (free VPU work at mem-bound). Matmuls run on
    # the MXU with f32 accumulation; bias add + ReLU stay on the f32 acc (VPU).
    x = x_ref[...].astype(w1_ref.dtype)
    h = jnp.dot(x, w1_ref[...], preferred_element_type=jnp.float32)
    h = jnp.maximum(h + b1_ref[...], 0.0)
    h = jnp.dot(h.astype(w2_ref.dtype), w2_ref[...],
                preferred_element_type=jnp.float32)
    h = jnp.maximum(h + b2_ref[...], 0.0)
    out = jnp.dot(h.astype(w3_ref.dtype), w3_ref[...],
                  preferred_element_type=jnp.float32)
    o_ref[...] = (out + b3_ref[...]).astype(o_ref.dtype)


# ---------------------------------------------------------------------------
# One-time parameter prep (hoisted out of the forward hot path)
# ---------------------------------------------------------------------------
def prepare_mlp_params(params, compute_dtype=jnp.bfloat16):
    """Pad hidden feature dims to a full 128-lane register and cast weights to
    the bf16 compute dtype.  Exact: padded channels produce ReLU(0+0)=0 and the
    corresponding zero rows of the next weight contribute nothing.  Biases stay
    f32 (they are added to the f32 accumulator).  Call ONCE per parameter set.

    params = (w1, b1, w2, b2, w3, b3); weights stored [fan_in, fan_out]
    (transpose of nn.Linear), biases as [1, fan_out]."""
    w1, b1, w2, b2, w3, b3 = params
    h1, h2 = w1.shape[1], w2.shape[1]
    h1p, h2p = _round_up(h1, LANE), _round_up(h2, LANE)
    w1p = jnp.pad(w1, ((0, 0), (0, h1p - h1))).astype(compute_dtype)
    b1p = jnp.pad(b1, ((0, 0), (0, h1p - h1))).astype(jnp.float32)
    w2p = jnp.pad(w2, ((0, h1p - h1), (0, h2p - h2))).astype(compute_dtype)
    b2p = jnp.pad(b2, ((0, 0), (0, h2p - h2))).astype(jnp.float32)
    w3p = jnp.pad(w3, ((0, h2p - h2), (0, 0))).astype(compute_dtype)
    b3p = b3.astype(jnp.float32)
    return (w1p, b1p, w2p, b2p, w3p, b3p)


def _choose_tm(B, tm_max=TM_DEFAULT):
    """Biggest 16-row-aligned tile <= tm_max that still yields >=2 grid steps
    (so dimension_semantics='parallel' can shard the batch over v7x's two
    TensorCores).  Tiny batches get one full-extent block."""
    if B <= 32:
        return B
    return min(tm_max, _round_up(pl.cdiv(B, 2), 16))


# ---------------------------------------------------------------------------
# Forward: hot path is reshape + pallas_call only
# ---------------------------------------------------------------------------
def mlp_forward(x, prepped_params, *, tm=None):
    """x: [B, ...] -> flattened to [B, dim_in] (== torch x.flatten(1)).
    prepped_params: output of prepare_mlp_params()."""
    w1p, b1p, w2p, b2p, w3p, b3p = prepped_params
    B = x.shape[0]
    x_flat = x.reshape(B, -1)                     # glue: torch's x.flatten(1)
    dim_in = x_flat.shape[1]
    assert w1p.shape[0] == dim_in, (w1p.shape, dim_in)
    h1p, h2p, dim_out = w1p.shape[1], w2p.shape[1], w3p.shape[1]

    # --- batch tiling --------------------------------------------------------
    tm = _choose_tm(B) if tm is None else min(int(tm), B)
    grid = (pl.cdiv(B, tm),)            # ragged tail -> Pallas last-block masking

    # --- scheduling hints ----------------------------------------------------
    in_itemsize = jnp.dtype(x_flat.dtype).itemsize
    out_itemsize = jnp.dtype(x.dtype).itemsize
    w_bytes = sum(a.size * a.dtype.itemsize for a in prepped_params)
    flops = 2 * B * (dim_in * h1p + h1p * h2p + h2p * dim_out)
    bytes_accessed = int(x_flat.size * in_itemsize
                         + B * dim_out * out_itemsize + w_bytes)

    # VMEM budget: double-buffered f32 x tile dominates; add headroom for the
    # in-kernel bf16 copy of x and the f32/bf16 hidden activations.  Raising
    # the scoped limit matters on v5e (16 MiB default); harmless elsewhere and
    # stays well below v7x's 64 MiB physical per TC.
    vmem_need = (2 * tm * dim_in * in_itemsize           # x double buffer
                 + 2 * tm * dim_out * out_itemsize       # out double buffer
                 + 2 * w_bytes                           # resident weights
                 + tm * (2 * dim_in + 6 * (h1p + h2p)))  # in-kernel temporaries
    vmem_limit = min(56 * 1024 * 1024,
                     max(32 * 1024 * 1024, int(vmem_need * 1.25)))

    return pl.pallas_call(
        mlp_kernel,
        out_shape=jax.ShapeDtypeStruct((B, dim_out), x.dtype),
        grid=grid,
        in_specs=[
            pl.BlockSpec((tm, dim_in), lambda i: (i, 0)),    # x: streamed (native dtype)
            pl.BlockSpec((dim_in, h1p), lambda i: (0, 0)),   # weights: resident
            pl.BlockSpec((1, h1p), lambda i: (0, 0)),
            pl.BlockSpec((h1p, h2p), lambda i: (0, 0)),
            pl.BlockSpec((1, h2p), lambda i: (0, 0)),
            pl.BlockSpec((h2p, dim_out), lambda i: (0, 0)),
            pl.BlockSpec((1, dim_out), lambda i: (0, 0)),
        ],
        out_specs=pl.BlockSpec((tm, dim_out), lambda i: (i, 0)),
        compiler_params=pltpu.CompilerParams(
            dimension_semantics=("parallel",),   # v7x: batch tiles over both TCs
            vmem_limit_bytes=vmem_limit),
        cost_estimate=pl.CostEstimate(
            flops=flops, transcendentals=0, bytes_accessed=bytes_accessed),
    )(x_flat, w1p, b1p, w2p, b2p, w3p, b3p)


# ---------------------------------------------------------------------------
# Deterministic parameter init (mirrors MLP.reset_parameters with p=1.0)
# ---------------------------------------------------------------------------
def init_mlp_params(key, dims, init_scale=1.0, dtype=jnp.float32):
    """dims = (dim_in, h1, h2, ..., dim_out). Returns (W, b) per layer with
    W laid out [fan_in, fan_out] and b as [1, fan_out]."""
    params = []
    for i in range(len(dims) - 1):
        fan_in, fan_out = dims[i], dims[i + 1]
        bound = math.sqrt(1.0 / fan_in) * init_scale
        key, kw, kb = jax.random.split(key, 3)
        w = jax.random.uniform(kw, (fan_in, fan_out), dtype, -bound, bound)
        b = jax.random.uniform(kb, (1, fan_out), dtype, -bound, bound)
        params.extend([w, b])
    return tuple(params)


# ---------------------------------------------------------------------------
# Pure-JAX (f32) reference for correctness checking
# ---------------------------------------------------------------------------
def mlp_ref(x, params):
    w1, b1, w2, b2, w3, b3 = params
    h = x.reshape(x.shape[0], -1)
    h = jnp.maximum(h @ w1 + b1, 0.0)
    h = jnp.maximum(h @ w2 + b2, 0.0)
    return h @ w3 + b3


if __name__ == "__main__":
    # MLP(dim_in=4*16*16, dim_out=8, dimh=(32, 32), nonlinearity='ReLU',
    #     bias=True, norm=None, dropout=None, sn=False, init_scale=1.0)
    B, C, H, W = 2, 4, 16, 16
    dim_in = C * H * W          # 1024 (x.flatten(1))
    dimh = (32, 32)
    dim_out = 8

    key = jax.random.PRNGKey(0)
    key, kx = jax.random.split(key)
    x = jax.random.normal(kx, (B, C, H, W), jnp.float32)   # NCHW input
    params = init_mlp_params(key, (dim_in,) + dimh + (dim_out,), init_scale=1.0)

    # One-time parameter prep (pad + bf16 cast), outside the hot path.
    prepped = prepare_mlp_params(params)
    prepped = jax.block_until_ready(prepped)

    # Tiny batch: single full-extent block (grid=(1,)).
    out = jax.block_until_ready(mlp_forward(x, prepped))
    ref = mlp_ref(x, params)
    assert out.shape == (B, dim_out), out.shape
    # bf16 compute with f32 accumulation -> loosened tolerance vs the f32 ref.
    assert jnp.allclose(out, ref, atol=5e-2, rtol=5e-2), (
        float(jnp.max(jnp.abs(out - ref))))

    # Medium batch: default tile chooser -> 2 grid steps (megacore-friendly),
    # ragged last tile handled by Pallas masking.
    B2 = 100
    key, kx2 = jax.random.split(key)
    x2 = jax.random.normal(kx2, (B2, C, H, W), jnp.float32)
    out2 = jax.block_until_ready(mlp_forward(x2, prepped))
    ref2 = mlp_ref(x2, params)
    assert out2.shape == (B2, dim_out), out2.shape
    assert jnp.allclose(out2, ref2, atol=5e-2, rtol=5e-2), (
        float(jnp.max(jnp.abs(out2 - ref2))))

    # Explicit small tile to exercise a longer pipelined grid (4 steps,
    # ragged final tile) with resident weights.
    out3 = jax.block_until_ready(mlp_forward(x2, prepped, tm=32))
    assert out3.shape == (B2, dim_out), out3.shape
    assert jnp.allclose(out3, ref2, atol=5e-2, rtol=5e-2), (
        float(jnp.max(jnp.abs(out3 - ref2))))

    print("KERNEL_OK")
</pallas_src>

<mosaic_0001>
module attributes {stable_mosaic.version = 11 : i64} {
  func.func @mlp_kernel(%arg0: i32, %arg1: memref<2x1024xf32, #tpu.memory_space<vmem>>, %arg2: memref<1024x128xbf16, #tpu.memory_space<vmem>>, %arg3: memref<1x128xf32, #tpu.memory_space<vmem>>, %arg4: memref<128x128xbf16, #tpu.memory_space<vmem>>, %arg5: memref<1x128xf32, #tpu.memory_space<vmem>>, %arg6: memref<128x8xbf16, #tpu.memory_space<vmem>>, %arg7: memref<1x8xf32, #tpu.memory_space<vmem>>, %arg8: memref<2x8xf32, #tpu.memory_space<vmem>>) attributes {dimension_semantics = [#tpu.dimension_semantics<parallel>], iteration_bounds = array<i64: 1>, scalar_prefetch = 0 : i64, scratch_operands = 0 : i64, tpu.core_type = #tpu.core_type<tc>, window_params = [{transform_indices = @transform_0, window_bounds = array<i64: 2, 1024>}, {pipeline_mode = #tpu.pipeline_mode<synchronous>, transform_indices = @transform_1, window_bounds = array<i64: 1024, 128>}, {pipeline_mode = #tpu.pipeline_mode<synchronous>, transform_indices = @transform_2, window_bounds = array<i64: 1, 128>}, {pipeline_mode = #tpu.pipeline_mode<synchronous>, transform_indices = @transform_3, window_bounds = array<i64: 128, 128>}, {pipeline_mode = #tpu.pipeline_mode<synchronous>, transform_indices = @transform_4, window_bounds = array<i64: 1, 128>}, {pipeline_mode = #tpu.pipeline_mode<synchronous>, transform_indices = @transform_5, window_bounds = array<i64: 128, 8>}, {pipeline_mode = #tpu.pipeline_mode<synchronous>, transform_indices = @transform_6, window_bounds = array<i64: 1, 8>}, {transform_indices = @transform_7, window_bounds = array<i64: 2, 8>}]} {
    %c0 = arith.constant 0 : index
    %c0_0 = arith.constant 0 : index
    %0 = vector.load %arg1[%c0, %c0_0] : memref<2x1024xf32, #tpu.memory_space<vmem>>, vector<2x1024xf32>
    %1 = arith.truncf %0 : vector<2x1024xf32> to vector<2x1024xbf16>
    %c0_1 = arith.constant 0 : index
    %c0_2 = arith.constant 0 : index
    %2 = vector.load %arg2[%c0_1, %c0_2] : memref<1024x128xbf16, #tpu.memory_space<vmem>>, vector<1024x128xbf16>
    %cst = arith.constant dense<0.000000e+00> : vector<2x128xf32>
    %3 = tpu.matmul %1, %2, %cst {dimension_numbers = #tpu.dot_dimension_numbers<[1], [0], [0], [1], [0, 0, 1, 1], [], []>} : vector<2x1024xbf16>, vector<1024x128xbf16>, vector<2x128xf32> -> vector<2x128xf32>
    %c0_3 = arith.constant 0 : index
    %c0_4 = arith.constant 0 : index
    %4 = vector.load %arg3[%c0_3, %c0_4] : memref<1x128xf32, #tpu.memory_space<vmem>>, vector<1x128xf32>
    %5 = vector.broadcast %4 : vector<1x128xf32> to vector<2x128xf32>
    %6 = arith.addf %3, %5 : vector<2x128xf32>
    %cst_5 = arith.constant 0.000000e+00 : f32
    %7 = vector.broadcast %cst_5 : f32 to vector<2x128xf32>
    %8 = arith.maximumf %6, %7 : vector<2x128xf32>
    %9 = arith.truncf %8 : vector<2x128xf32> to vector<2x128xbf16>
    %c0_6 = arith.constant 0 : index
    %c0_7 = arith.constant 0 : index
    %10 = vector.load %arg4[%c0_6, %c0_7] : memref<128x128xbf16, #tpu.memory_space<vmem>>, vector<128x128xbf16>
    %cst_8 = arith.constant dense<0.000000e+00> : vector<2x128xf32>
    %11 = tpu.matmul %9, %10, %cst_8 {dimension_numbers = #tpu.dot_dimension_numbers<[1], [0], [0], [1], [0, 0, 1, 1], [], []>} : vector<2x128xbf16>, vector<128x128xbf16>, vector<2x128xf32> -> vector<2x128xf32>
    %c0_9 = arith.constant 0 : index
    %c0_10 = arith.constant 0 : index
    %12 = vector.load %arg5[%c0_9, %c0_10] : memref<1x128xf32, #tpu.memory_space<vmem>>, vector<1x128xf32>
    %13 = vector.broadcast %12 : vector<1x128xf32> to vector<2x128xf32>
    %14 = arith.addf %11, %13 : vector<2x128xf32>
    %cst_11 = arith.constant 0.000000e+00 : f32
    %15 = vector.broadcast %cst_11 : f32 to vector<2x128xf32>
    %16 = arith.maximumf %14, %15 : vector<2x128xf32>
    %17 = arith.truncf %16 : vector<2x128xf32> to vector<2x128xbf16>
    %c0_12 = arith.constant 0 : index
    %c0_13 = arith.constant 0 : index
    %18 = vector.load %arg6[%c0_12, %c0_13] : memref<128x8xbf16, #tpu.memory_space<vmem>>, vector<128x8xbf16>
    %cst_14 = arith.constant dense<0.000000e+00> : vector<2x8xf32>
    %19 = tpu.matmul %17, %18, %cst_14 {dimension_numbers = #tpu.dot_dimension_numbers<[1], [0], [0], [1], [0, 0, 1, 1], [], []>} : vector<2x128xbf16>, vector<128x8xbf16>, vector<2x8xf32> -> vector<2x8xf32>
    %c0_15 = arith.constant 0 : index
    %c0_16 = arith.constant 0 : index
    %20 = vector.load %arg7[%c0_15, %c0_16] : memref<1x8xf32, #tpu.memory_space<vmem>>, vector<1x8xf32>
    %21 = vector.broadcast %20 : vector<1x8xf32> to vector<2x8xf32>
    %22 = arith.addf %19, %21 : vector<2x8xf32>
    %c0_17 = arith.constant 0 : index
    %c0_18 = arith.constant 0 : index
    %23 = vector.load %arg8[%c0_17, %c0_18] : memref<2x8xf32, #tpu.memory_space<vmem>>, vector<2x8xf32>
    tpu.vector_store %arg8[%c0_17, %c0_18], %22 {strides = array<i32>} : memref<2x8xf32, #tpu.memory_space<vmem>>, vector<2x8xf32>,
    return
  }
  func.func @transform_0(%arg0: i32) -> (i32, i32) {
    %c0_i32 = arith.constant 0 : i32
    %c0_i32_0 = arith.constant 0 : i32
    return %arg0, %c0_i32 : i32, i32
  }
  func.func @transform_1(%arg0: i32) -> (i32, i32) {
    %c0_i32 = arith.constant 0 : i32
    %c0_i32_0 = arith.constant 0 : i32
    %c0_i32_1 = arith.constant 0 : i32
    return %c0_i32, %c0_i32_0 : i32, i32
  }
  func.func @transform_2(%arg0: i32) -> (i32, i32) {
    %c0_i32 = arith.constant 0 : i32
    %c0_i32_0 = arith.constant 0 : i32
    %c0_i32_1 = arith.constant 0 : i32
    return %c0_i32, %c0_i32_0 : i32, i32
  }
  func.func @transform_3(%arg0: i32) -> (i32, i32) {
    %c0_i32 = arith.constant 0 : i32
    %c0_i32_0 = arith.constant 0 : i32
    %c0_i32_1 = arith.constant 0 : i32
    return %c0_i32, %c0_i32_0 : i32, i32
  }
  func.func @transform_4(%arg0: i32) -> (i32, i32) {
    %c0_i32 = arith.constant 0 : i32
    %c0_i32_0 = arith.constant 0 : i32
    %c0_i32_1 = arith.constant 0 : i32
    return %c0_i32, %c0_i32_0 : i32, i32
  }
  func.func @transform_5(%arg0: i32) -> (i32, i32) {
    %c0_i32 = arith.constant 0 : i32
    %c0_i32_0 = arith.constant 0 : i32
    %c0_i32_1 = arith.constant 0 : i32
    return %c0_i32, %c0_i32_0 : i32, i32
  }
  func.func @transform_6(%arg0: i32) -> (i32, i32) {
    %c0_i32 = arith.constant 0 : i32
    %c0_i32_0 = arith.constant 0 : i32
    %c0_i32_1 = arith.constant 0 : i32
    return %c0_i32, %c0_i32_0 : i32, i32
  }
  func.func @transform_7(%arg0: i32) -> (i32, i32) {
    %c0_i32 = arith.constant 0 : i32
    %c0_i32_0 = arith.constant 0 : i32
    return %arg0, %c0_i32 : i32, i32
  }
}

</mosaic_0001>

<llo_original>
// kernel: tpu_custom_call.1
$region0: #{tpu_custom_call.1}
  #allocation0 [shape = 'u32[]', space=smem, size = 0x4, offset = 0x4, fixed_abs, tag = 'smem constant byte address 0x4 - core index']
  #allocation1 [shape = 'u32[144,128]{1,0:T(1,128)}', space=vmem, size = 0x12000, scoped, tag = 'internal scratch']
  %s0 = inlined_call_operand.hbm [shape: f32[2,1024], index: 0, kind: input, shape index: {}]
  %s1 = inlined_call_operand.hbm [shape: bf16[1024,128], index: 1, kind: input, shape index: {}]
  %s2 = inlined_call_operand.vmem [shape: f32[1,128], index: 2, kind: input, shape index: {}]
  %s3 = inlined_call_operand.vmem [shape: bf16[128,128], index: 3, kind: input, shape index: {}]
  %s4 = inlined_call_operand.vmem [shape: f32[1,128], index: 4, kind: input, shape index: {}]
  %s5 = inlined_call_operand.vmem [shape: bf16[128,8], index: 5, kind: input, shape index: {}]
  %s6 = inlined_call_operand.vmem [shape: f32[1,8], index: 6, kind: input, shape index: {}]
  %s7 = inlined_call_operand.hbm [shape: f32[2,8], index: 7, kind: output, shape index: {}]
  %s8 = sld [smem:[#allocation0]]
  $region46: #{tpu_custom_call.1} parent=0
    _
  %s10 = ssub.s32 1, %s8
  %s11 = scalar_select 0, %s10, %s8
  $region1: #{tpu_custom_call.1} parent=0
    #allocation2 [shape = 'u8[8192]{0}', space=vmem, size = 0x2000, scoped, tag = 'input window, operand 0, single buffered']
    #allocation3 [shape = 's32[1]{0}', space=sflag, size = 0x4, scoped, tag = 'scoped memory for tpu_custom_call.1']
    #allocation4 [shape = 's32[1]{0}', space=sflag, size = 0x4, scoped, tag = 'scoped memory for tpu_custom_call.1']
    #allocation5 [shape = 'u8[262144]{0}', space=vmem, size = 0x40000, scoped, tag = 'input window, operand 1, single buffered']
    #allocation6 [shape = 's32[1]{0}', space=sflag, size = 0x4, scoped, tag = 'scoped memory for tpu_custom_call.1']
    #allocation7 [shape = 'u8[1024]{0}', space=vmem, size = 0x400, scoped, tag = 'output window, operand 0, single buffered']
    %12 = vsyncpa [#allocation3], 0
    %13 = vsyncpa [#allocation6], 0
    %14 = vsyncpa [#allocation4], 0
    // Predicated region
    $region2: #{tpu_custom_call.1} parent=1 // pred_check
      _
    $region3: #{tpu_custom_call.1} parent=1 // pred_check_branch
      %16 = sbr.rel (0) target = $region5
    $region4: #{tpu_custom_call.1} parent=1 // pred_region
      %s18 = ssub.s32 256, 256
      %19 = vsyncadd [#allocation3], %s18
      %s21 = sshll.u32 [#allocation2], 4
      %s22 = int_to_ptr.vmem [resolvable:$true] %s21
      %24 = dma.hbm_to_vmem [thread:$0]  %s0, 256, %s22, [#allocation3]
    $region5: #{tpu_custom_call.1} parent=1 // pred_fallthru
      _
    // Predicated region
    $region6: #{tpu_custom_call.1} parent=1 // pred_check
      _
    $region7: #{tpu_custom_call.1} parent=1 // pred_check_branch
      %26 = sbr.rel (0) target = $region9
    $region8: #{tpu_custom_call.1} parent=1 // pred_region
      %s28 = ssub.s32 8192, 8192
      %29 = vsyncadd [#allocation6], %s28
      %s30 = sshll.u32 [#allocation5], 4
      %s31 = int_to_ptr.vmem [resolvable:$true] %s30
      %36 = dma.hbm_to_vmem [thread:$0]  %s1, 8192, %s31, [#allocation6], 64, 64, 4
    $region9: #{tpu_custom_call.1} parent=1 // pred_fallthru
      _
    // Predicated region
    $region10: #{tpu_custom_call.1} parent=1 // pred_check
      _
    $region11: #{tpu_custom_call.1} parent=1 // pred_check_branch
      %38 = sbr.rel (0) target = $region13
    $region12: #{tpu_custom_call.1} parent=1 // pred_region
      _
    $region13: #{tpu_custom_call.1} parent=1 // pred_fallthru
      _
    // Predicated region
    $region14: #{tpu_custom_call.1} parent=1 // pred_check
      _
    $region15: #{tpu_custom_call.1} parent=1 // pred_check_branch
      %40 = sbr.rel (0) target = $region17
    $region16: #{tpu_custom_call.1} parent=1 // pred_region
      _
    $region17: #{tpu_custom_call.1} parent=1 // pred_fallthru
      _
    // Predicated region
    $region18: #{tpu_custom_call.1} parent=1 // pred_check
      _
    $region19: #{tpu_custom_call.1} parent=1 // pred_check_branch
      %42 = sbr.rel (0) target = $region21
    $region20: #{tpu_custom_call.1} parent=1 // pred_region
      _
    $region21: #{tpu_custom_call.1} parent=1 // pred_fallthru
      _
    // Predicated region
    $region22: #{tpu_custom_call.1} parent=1 // pred_check
      _
    $region23: #{tpu_custom_call.1} parent=1 // pred_check_branch
      %44 = sbr.rel (0) target = $region25
    $region24: #{tpu_custom_call.1} parent=1 // pred_region
      _
    $region25: #{tpu_custom_call.1} parent=1 // pred_fallthru
      _
    // Predicated region
    $region26: #{tpu_custom_call.1} parent=1 // pred_check
      _
    $region27: #{tpu_custom_call.1} parent=1 // pred_check_branch
      %46 = sbr.rel (0) target = $region29
    $region28: #{tpu_custom_call.1} parent=1 // pred_region
      _
    $region29: #{tpu_custom_call.1} parent=1 // pred_fallthru
      _
    // Predicated region
    $region30: #{tpu_custom_call.1} parent=1 // pred_check
      _
    $region31: #{tpu_custom_call.1} parent=1 // pred_check_branch
      %48 = sbr.rel (0) target = $region33
    $region32: #{tpu_custom_call.1} parent=1 // pred_region
      %49 = dma.done [#allocation3], 256
    $region33: #{tpu_custom_call.1} parent=1 // pred_fallthru
      _
    // Predicated region
    $region34: #{tpu_custom_call.1} parent=1 // pred_check
      _
    $region35: #{tpu_custom_call.1} parent=1 // pred_check_branch
      %51 = sbr.rel (0) target = $region37
    $region36: #{tpu_custom_call.1} parent=1 // pred_region
      %52 = dma.done [#allocation6], 8192
    $region37: #{tpu_custom_call.1} parent=1 // pred_fallthru
      _
    %v54 = vld [vmem:[#allocation2] sm:$0xff]
    %v55 = vld [vmem:[#allocation2 + $0x8] sm:$0xff]
    %v58 = vcombine.high %v54, %v54
    %v60 = vunpack.c.l.s4 1983009808
    %v61 = vunpack.c.0.s8 %v60
    %v62 = vlaneseq
    %v63 = vshrl.u32 %v62, 7
    %v64 = vsub.s32 %v61, %v63
    %v65 = vrot.slane %v54, %v64
    %v67 = vunpack.c.l.s4 1983009808
    %v68 = vunpack.c.0.s8 %v67
    %v69 = vlaneseq
    %v70 = vshrl.u32 %v69, 7
    %v71 = vsub.s32 %v68, %v70
    %v72 = vrot.slane %v58, %v71
    %v73 = vcombine.high %v65, %v65
    %v74 = vcombine.high %v72, %v72
    %v75 = vcombine.high %v55, %v55
    %v77 = vunpack.c.l.s4 1983009808
    %v78 = vunpack.c.0.s8 %v77
    %v79 = vlaneseq
    %v80 = vshrl.u32 %v79, 7
    %v81 = vsub.s32 %v78, %v80
    %v82 = vrot.slane %v55, %v81
    %v84 = vunpack.c.l.s4 1983009808
    %v85 = vunpack.c.0.s8 %v84
    %v86 = vlaneseq
    %v87 = vshrl.u32 %v86, 7
    %v88 = vsub.s32 %v85, %v87
    %v89 = vrot.slane %v75, %v88
    %v90 = vcombine.high %v82, %v82
    %v91 = vcombine.high %v89, %v89
    %v100 = vpack.c.bf16 %v65, %v65
    %v101 = vpack.c.bf16 %v73, %v73
    %v102 = vpack.c.bf16 %v72, %v72
    %v103 = vpack.c.bf16 %v74, %v74
    %v104 = vpack.c.bf16 %v82, %v82
    %v105 = vpack.c.bf16 %v90, %v90
    %v106 = vpack.c.bf16 %v89, %v89
    %v107 = vpack.c.bf16 %v91, %v91
    %v108 = vld [vmem:[#allocation5] sm:$0xf]
    %v109 = vld [vmem:[#allocation5 + $0x4] sm:$0xf]
    %v110 = vld [vmem:[#allocation5 + $0x8] sm:$0xf]
    %v111 = vld [vmem:[#allocation5 + $0xc] sm:$0xf]
    %v112 = vld [vmem:[#allocation5 + $0x10] sm:$0xf]
    %v113 = vld [vmem:[#allocation5 + $0x14] sm:$0xf]
    %v114 = vld [vmem:[#allocation5 + $0x18] sm:$0xf]
    %v115 = vld [vmem:[#allocation5 + $0x1c] sm:$0xf]
    %v116 = vld [vmem:[#allocation5 + $0x20] sm:$0xf]
    %v117 = vld [vmem:[#allocation5 + $0x24] sm:$0xf]
    %v118 = vld [vmem:[#allocation5 + $0x28] sm:$0xf]
    %v119 = vld [vmem:[#allocation5 + $0x2c] sm:$0xf]
    %v120 = vld [vmem:[#allocation5 + $0x30] sm:$0xf]
    %v121 = vld [vmem:[#allocation5 + $0x34] sm:$0xf]
    %v122 = vld [vmem:[#allocation5 + $0x38] sm:$0xf]
    %v123 = vld [vmem:[#allocation5 + $0x3c] sm:$0xf]
    %v124 = vld [vmem:[#allocation5 + $0x40] sm:$0xf]
    %v125 = vld [vmem:[#allocation5 + $0x44] sm:$0xf]
    %v126 = vld [vmem:[#allocation5 + $0x48] sm:$0xf]
    %v127 = vld [vmem:[#allocation5 + $0x4c] sm:$0xf]
    %v128 = vld [vmem:[#allocation5 + $0x50] sm:$0xf]
    %v129 = vld [vmem:[#allocation5 + $0x54] sm:$0xf]
    %v130 = vld [vmem:[#allocation5 + $0x58] sm:$0xf]
    %v131 = vld [vmem:[#allocation5 + $0x5c] sm:$0xf]
    %v132 = vld [vmem:[#allocation5 + $0x60] sm:$0xf]
    %v133 = vld [vmem:[#allocation5 + $0x64] sm:$0xf]
    %v134 = vld [vmem:[#allocation5 + $0x68] sm:$0xf]
    %v135 = vld [vmem:[#allocation5 + $0x6c] sm:$0xf]
    %v136 = vld [vmem:[#allocation5 + $0x70] sm:$0xf]
    %v137 = vld [vmem:[#allocation5 + $0x74] sm:$0xf]
    %v138 = vld [vmem:[#allocation5 + $0x78] sm:$0xf]
    %v139 = vld [vmem:[#allocation5 + $0x7c] sm:$0xf]
    %v140 = vld [vmem:[#allocation5 + $0x80] sm:$0xf]
    %v141 = vld [vmem:[#allocation5 + $0x84] sm:$0xf]
    %v142 = vld [vmem:[#allocation5 + $0x88] sm:$0xf]
    %v143 = vld [vmem:[#allocation5 + $0x8c] sm:$0xf]
    %v144 = vld [vmem:[#allocation5 + $0x90] sm:$0xf]
    %v145 = vld [vmem:[#allocation5 + $0x94] sm:$0xf]
    %v146 = vld [vmem:[#allocation5 + $0x98] sm:$0xf]
    %v147 = vld [vmem:[#allocation5 + $0x9c] sm:$0xf]
    %v148 = vld [vmem:[#allocation5 + $0xa0] sm:$0xf]
    %v149 = vld [vmem:[#allocation5 + $0xa4] sm:$0xf]
    %v150 = vld [vmem:[#allocation5 + $0xa8] sm:$0xf]
    %v151 = vld [vmem:[#allocation5 + $0xac] sm:$0xf]
    %v152 = vld [vmem:[#allocation5 + $0xb0] sm:$0xf]
    %v153 = vld [vmem:[#allocation5 + $0xb4] sm:$0xf]
    %v154 = vld [vmem:[#allocation5 + $0xb8] sm:$0xf]
    %v155 = vld [vmem:[#allocation5 + $0xbc] sm:$0xf]
    %v156 = vld [vmem:[#allocation5 + $0xc0] sm:$0xf]
    %v157 = vld [vmem:[#allocation5 + $0xc4] sm:$0xf]
    %v158 = vld [vmem:[#allocation5 + $0xc8] sm:$0xf]
    %v159 = vld [vmem:[#allocation5 + $0xcc] sm:$0xf]
    %v160 = vld [vmem:[#allocation5 + $0xd0] sm:$0xf]
    %v161 = vld [vmem:[#allocation5 + $0xd4] sm:$0xf]
    %v162 = vld [vmem:[#allocation5 + $0xd8] sm:$0xf]
    %v163 = vld [vmem:[#allocation5 + $0xdc] sm:$0xf]
    %v164 = vld [vmem:[#allocation5 + $0xe0] sm:$0xf]
    %v165 = vld [vmem:[#allocation5 + $0xe4] sm:$0xf]
    %v166 = vld [vmem:[#allocation5 + $0xe8] sm:$0xf]
    %v167 = vld [vmem:[#allocation5 + $0xec] sm:$0xf]
    %v168 = vld [vmem:[#allocation5 + $0xf0] sm:$0xf]
    %v169 = vld [vmem:[#allocation5 + $0xf4] sm:$0xf]
    %v170 = vld [vmem:[#allocation5 + $0xf8] sm:$0xf]
    %v171 = vld [vmem:[#allocation5 + $0xfc] sm:$0xf]
    %v172 = vld [vmem:[#allocation5 + $0x100] sm:$0xf]
    %v173 = vld [vmem:[#allocation5 + $0x104] sm:$0xf]
    %v174 = vld [vmem:[#allocation5 + $0x108] sm:$0xf]
    %v175 = vld [vmem:[#allocation5 + $0x10c] sm:$0xf]
    %v176 = vld [vmem:[#allocation5 + $0x110] sm:$0xf]
    %v177 = vld [vmem:[#allocation5 + $0x114] sm:$0xf]
    %v178 = vld [vmem:[#allocation5 + $0x118] sm:$0xf]
    %v179 = vld [vmem:[#allocation5 + $0x11c] sm:$0xf]
    %v180 = vld [vmem:[#allocation5 + $0x120] sm:$0xf]
    %v181 = vld [vmem:[#allocation5 + $0x124] sm:$0xf]
    %v182 = vld [vmem:[#allocation5 + $0x128] sm:$0xf]
    %v183 = vld [vmem:[#allocation5 + $0x12c] sm:$0xf]
    %v184 = vld [vmem:[#allocation5 + $0x130] sm:$0xf]
    %v185 = vld [vmem:[#allocation5 + $0x134] sm:$0xf]
    %v186 = vld [vmem:[#allocation5 + $0x138] sm:$0xf]
    %v187 = vld [vmem:[#allocation5 + $0x13c] sm:$0xf]
    %v188 = vld [vmem:[#allocation5 + $0x140] sm:$0xf]
    %v189 = vld [vmem:[#allocation5 + $0x144] sm:$0xf]
    %v190 = vld [vmem:[#allocation5 + $0x148] sm:$0xf]
    %v191 = vld [vmem:[#allocation5 + $0x14c] sm:$0xf]
    %v192 = vld [vmem:[#allocation5 + $0x150] sm:$0xf]
    %v193 = vld [vmem:[#allocation5 + $0x154] sm:$0xf]
    %v194 = vld [vmem:[#allocation5 + $0x158] sm:$0xf]
    %v195 = vld [vmem:[#allocation5 + $0x15c] sm:$0xf]
    %v196 = vld [vmem:[#allocation5 + $0x160] sm:$0xf]
    %v197 = vld [vmem:[#allocation5 + $0x164] sm:$0xf]
    %v198 = vld [vmem:[#allocation5 + $0x168] sm:$0xf]
    %v199 = vld [vmem:[#allocation5 + $0x16c] sm:$0xf]
    %v200 = vld [vmem:[#allocation5 + $0x170] sm:$0xf]
    %v201 = vld [vmem:[#allocation5 + $0x174] sm:$0xf]
    %v202 = vld [vmem:[#allocation5 + $0x178] sm:$0xf]
    %v203 = vld [vmem:[#allocation5 + $0x17c] sm:$0xf]
    %v204 = vld [vmem:[#allocation5 + $0x180] sm:$0xf]
    %v205 = vld [vmem:[#allocation5 + $0x184] sm:$0xf]
    %v206 = vld [vmem:[#allocation5 + $0x188] sm:$0xf]
    %v207 = vld [vmem:[#allocation5 + $0x18c] sm:$0xf]
    %v208 = vld [vmem:[#allocation5 + $0x190] sm:$0xf]
    %v209 = vld [vmem:[#allocation5 + $0x194] sm:$0xf]
    %v210 = vld [vmem:[#allocation5 + $0x198] sm:$0xf]
    %v211 = vld [vmem:[#allocation5 + $0x19c] sm:$0xf]
    %v212 = vld [vmem:[#allocation5 + $0x1a0] sm:$0xf]
    %v213 = vld [vmem:[#allocation5 + $0x1a4] sm:$0xf]
    %v214 = vld [vmem:[#allocation5 + $0x1a8] sm:$0xf]
    %v215 = vld [vmem:[#allocation5 + $0x1ac] sm:$0xf]
    %v216 = vld [vmem:[#allocation5 + $0x1b0] sm:$0xf]
    %v217 = vld [vmem:[#allocation5 + $0x1b4] sm:$0xf]
    %v218 = vld [vmem:[#allocation5 + $0x1b8] sm:$0xf]
    %v219 = vld [vmem:[#allocation5 + $0x1bc] sm:$0xf]
    %v220 = vld [vmem:[#allocation5 + $0x1c0] sm:$0xf]
    %v221 = vld [vmem:[#allocation5 + $0x1c4] sm:$0xf]
    %v222 = vld [vmem:[#allocation5 + $0x1c8] sm:$0xf]
    %v223 = vld [vmem:[#allocation5 + $0x1cc] sm:$0xf]
    %v224 = vld [vmem:[#allocation5 + $0x1d0] sm:$0xf]
    %v225 = vld [vmem:[#allocation5 + $0x1d4] sm:$0xf]
    %v226 = vld [vmem:[#allocation5 + $0x1d8] sm:$0xf]
    %v227 = vld [vmem:[#allocation5 + $0x1dc] sm:$0xf]
    %v228 = vld [vmem:[#allocation5 + $0x1e0] sm:$0xf]
    %v229 = vld [vmem:[#allocation5 + $0x1e4] sm:$0xf]
    %v230 = vld [vmem:[#allocation5 + $0x1e8] sm:$0xf]
    %v231 = vld [vmem:[#allocation5 + $0x1ec] sm:$0xf]
    %v232 = vld [vmem:[#allocation5 + $0x1f0] sm:$0xf]
    %v233 = vld [vmem:[#allocation5 + $0x1f4] sm:$0xf]
    %v234 = vld [vmem:[#allocation5 + $0x1f8] sm:$0xf]
    %v235 = vld [vmem:[#allocation5 + $0x1fc] sm:$0xf]
    %v236 = vld [vmem:[%s2] sm:$0x1]
    %v238 = vlaneseq
    %v239 = vshrl.u32 %v238, 7
    %v240 = vsub.s32 0, %v239
    %v241 = vrot.slane %v236, %v240
    %v371 = vunpack.c.l.b16 %v108
    %v372 = vunpack.c.l.b16 %v109
    %v373 = vunpack.c.l.b16 %v110
    %v374 = vunpack.c.l.b16 %v111
    %v375 = vunpack.c.l.b16 %v112
    %v376 = vunpack.c.l.b16 %v113
    %v377 = vunpack.c.l.b16 %v114
    %v378 = vunpack.c.l.b16 %v115
    %v379 = vunpack.c.l.b16 %v116
    %v380 = vunpack.c.l.b16 %v117
    %v381 = vunpack.c.l.b16 %v118
    %v382 = vunpack.c.l.b16 %v119
    %v383 = vunpack.c.l.b16 %v120
    %v384 = vunpack.c.l.b16 %v121
    %v385 = vunpack.c.l.b16 %v122
    %v386 = vunpack.c.l.b16 %v123
    %v387 = vunpack.c.l.b16 %v124
    %v388 = vunpack.c.l.b16 %v125
    %v389 = vunpack.c.l.b16 %v126
    %v390 = vunpack.c.l.b16 %v127
    %v391 = vunpack.c.l.b16 %v128
    %v392 = vunpack.c.l.b16 %v129
    %v393 = vunpack.c.l.b16 %v130
    %v394 = vunpack.c.l.b16 %v131
    %v395 = vunpack.c.l.b16 %v132
    %v396 = vunpack.c.l.b16 %v133
    %v397 = vunpack.c.l.b16 %v134
    %v398 = vunpack.c.l.b16 %v135
    %v399 = vunpack.c.l.b16 %v136
    %v400 = vunpack.c.l.b16 %v137
    %v401 = vunpack.c.l.b16 %v138
    %v402 = vunpack.c.l.b16 %v139
    %v403 = vunpack.c.l.b16 %v140
    %v404 = vunpack.c.l.b16 %v141
    %v405 = vunpack.c.l.b16 %v142
    %v406 = vunpack.c.l.b16 %v143
    %v407 = vunpack.c.l.b16 %v144
    %v408 = vunpack.c.l.b16 %v145
    %v409 = vunpack.c.l.b16 %v146
    %v410 = vunpack.c.l.b16 %v147
    %v411 = vunpack.c.l.b16 %v148
    %v412 = vunpack.c.l.b16 %v149
    %v413 = vunpack.c.l.b16 %v150
    %v414 = vunpack.c.l.b16 %v151
    %v415 = vunpack.c.l.b16 %v152
    %v416 = vunpack.c.l.b16 %v153
    %v417 = vunpack.c.l.b16 %v154
    %v418 = vunpack.c.l.b16 %v155
    %v419 = vunpack.c.l.b16 %v156
    %v420 = vunpack.c.l.b16 %v157
    %v421 = vunpack.c.l.b16 %v158
    %v422 = vunpack.c.l.b16 %v159
    %v423 = vunpack.c.l.b16 %v160
    %v424 = vunpack.c.l.b16 %v161
    %v425 = vunpack.c.l.b16 %v162
    %v426 = vunpack.c.l.b16 %v163
    %v427 = vunpack.c.l.b16 %v164
    %v428 = vunpack.c.l.b16 %v165
    %v429 = vunpack.c.l.b16 %v166
    %v430 = vunpack.c.l.b16 %v167
    %v431 = vunpack.c.l.b16 %v168
    %v432 = vunpack.c.l.b16 %v169
    %v433 = vunpack.c.l.b16 %v170
    %v434 = vunpack.c.l.b16 %v171
    %v435 = vunpack.c.l.b16 %v172
    %v436 = vunpack.c.l.b16 %v173
    %v437 = vunpack.c.l.b16 %v174
    %v438 = vunpack.c.l.b16 %v175
    %v439 = vunpack.c.l.b16 %v176
    %v440 = vunpack.c.l.b16 %v177
    %v441 = vunpack.c.l.b16 %v178
    %v442 = vunpack.c.l.b16 %v179
    %v443 = vunpack.c.l.b16 %v180
    %v444 = vunpack.c.l.b16 %v181
    %v445 = vunpack.c.l.b16 %v182
    %v446 = vunpack.c.l.b16 %v183
    %v447 = vunpack.c.l.b16 %v184
    %v448 = vunpack.c.l.b16 %v185
    %v449 = vunpack.c.l.b16 %v186
    %v450 = vunpack.c.l.b16 %v187
    %v451 = vunpack.c.l.b16 %v188
    %v452 = vunpack.c.l.b16 %v189
    %v453 = vunpack.c.l.b16 %v190
    %v454 = vunpack.c.l.b16 %v191
    %v455 = vunpack.c.l.b16 %v192
    %v456 = vunpack.c.l.b16 %v193
    %v457 = vunpack.c.l.b16 %v194
    %v458 = vunpack.c.l.b16 %v195
    %v459 = vunpack.c.l.b16 %v196
    %v460 = vunpack.c.l.b16 %v197
    %v461 = vunpack.c.l.b16 %v198
    %v462 = vunpack.c.l.b16 %v199
    %v463 = vunpack.c.l.b16 %v200
    %v464 = vunpack.c.l.b16 %v201
    %v465 = vunpack.c.l.b16 %v202
    %v466 = vunpack.c.l.b16 %v203
    %v467 = vunpack.c.l.b16 %v204
    %v468 = vunpack.c.l.b16 %v205
    %v469 = vunpack.c.l.b16 %v206
    %v470 = vunpack.c.l.b16 %v207
    %v471 = vunpack.c.l.b16 %v208
    %v472 = vunpack.c.l.b16 %v209
    %v473 = vunpack.c.l.b16 %v210
    %v474 = vunpack.c.l.b16 %v211
    %v475 = vunpack.c.l.b16 %v212
    %v476 = vunpack.c.l.b16 %v213
    %v477 = vunpack.c.l.b16 %v214
    %v478 = vunpack.c.l.b16 %v215
    %v479 = vunpack.c.l.b16 %v216
    %v480 = vunpack.c.l.b16 %v217
    %v481 = vunpack.c.l.b16 %v218
    %v482 = vunpack.c.l.b16 %v219
    %v483 = vunpack.c.l.b16 %v220
    %v484 = vunpack.c.l.b16 %v221
    %v485 = vunpack.c.l.b16 %v222
    %v486 = vunpack.c.l.b16 %v223
    %v487 = vunpack.c.l.b16 %v224
    %v488 = vunpack.c.l.b16 %v225
    %v489 = vunpack.c.l.b16 %v226
    %v490 = vunpack.c.l.b16 %v227
    %v491 = vunpack.c.l.b16 %v228
    %v492 = vunpack.c.l.b16 %v229
    %v493 = vunpack.c.l.b16 %v230
    %v494 = vunpack.c.l.b16 %v231
    %v495 = vunpack.c.l.b16 %v232
    %v496 = vunpack.c.l.b16 %v233
    %v497 = vunpack.c.l.b16 %v234
    %v498 = vunpack.c.l.b16 %v235
    %v499 = vpack.c.b16 %v372, %v371
    %v500 = vpack.c.b16 %v374, %v373
    %v501 = vpack.c.b16 %v376, %v375
    %v502 = vpack.c.b16 %v378, %v377
    %v503 = vpack.c.b16 %v380, %v379
    %v504 = vpack.c.b16 %v382, %v381
    %v505 = vpack.c.b16 %v384, %v383
    %v506 = vpack.c.b16 %v386, %v385
    %v507 = vpack.c.b16 %v388, %v387
    %v508 = vpack.c.b16 %v390, %v389
    %v509 = vpack.c.b16 %v392, %v391
    %v510 = vpack.c.b16 %v394, %v393
    %v511 = vpack.c.b16 %v396, %v395
    %v512 = vpack.c.b16 %v398, %v397
    %v513 = vpack.c.b16 %v400, %v399
    %v514 = vpack.c.b16 %v402, %v401
    %v515 = vpack.c.b16 %v404, %v403
    %v516 = vpack.c.b16 %v406, %v405
    %v517 = vpack.c.b16 %v408, %v407
    %v518 = vpack.c.b16 %v410, %v409
    %v519 = vpack.c.b16 %v412, %v411
    %v520 = vpack.c.b16 %v414, %v413
    %v521 = vpack.c.b16 %v416, %v415
    %v522 = vpack.c.b16 %v418, %v417
    %v523 = vpack.c.b16 %v420, %v419
    %v524 = vpack.c.b16 %v422, %v421
    %v525 = vpack.c.b16 %v424, %v423
    %v526 = vpack.c.b16 %v426, %v425
    %v527 = vpack.c.b16 %v428, %v427
    %v528 = vpack.c.b16 %v430, %v429
    %v529 = vpack.c.b16 %v432, %v431
    %v530 = vpack.c.b16 %v434, %v433
    %v531 = vpack.c.b16 %v436, %v435
    %v532 = vpack.c.b16 %v438, %v437
    %v533 = vpack.c.b16 %v440, %v439
    %v534 = vpack.c.b16 %v442, %v441
    %v535 = vpack.c.b16 %v444, %v443
    %v536 = vpack.c.b16 %v446, %v445
    %v537 = vpack.c.b16 %v448, %v447
    %v538 = vpack.c.b16 %v450, %v449
    %v539 = vpack.c.b16 %v452, %v451
    %v540 = vpack.c.b16 %v454, %v453
    %v541 = vpack.c.b16 %v456, %v455
    %v542 = vpack.c.b16 %v458, %v457
    %v543 = vpack.c.b16 %v460, %v459
    %v544 = vpack.c.b16 %v462, %v461
    %v545 = vpack.c.b16 %v464, %v463
    %v546 = vpack.c.b16 %v466, %v465
    %v547 = vpack.c.b16 %v468, %v467
    %v548 = vpack.c.b16 %v470, %v469
    %v549 = vpack.c.b16 %v472, %v471
    %v550 = vpack.c.b16 %v474, %v473
    %v551 = vpack.c.b16 %v476, %v475
    %v552 = vpack.c.b16 %v478, %v477
    %v553 = vpack.c.b16 %v480, %v479
    %v554 = vpack.c.b16 %v482, %v481
    %v555 = vpack.c.b16 %v484, %v483
    %v556 = vpack.c.b16 %v486, %v485
    %v557 = vpack.c.b16 %v488, %v487
    %v558 = vpack.c.b16 %v490, %v489
    %v559 = vpack.c.b16 %v492, %v491
    %v560 = vpack.c.b16 %v494, %v493
    %v561 = vpack.c.b16 %v496, %v495
    %v562 = vpack.c.b16 %v498, %v497
    %627 = vmatprep.subr.bf16.mxu0 0
    %628 = vmatpush1.bf16.msra.mxu0 %v499
    %629 = vmatprep.subr.bf16.mxu0 0
    %630 = vmatpush1.bf16.msra.mxu0 %v500
    %631 = vmatprep.subr.bf16.mxu0 0
    %632 = vmatpush1.bf16.msra.mxu0 %v501
    %633 = vmatprep.subr.bf16.mxu0 0
    %634 = vmatpush1.bf16.msra.mxu0 %v502
    %635 = vmatprep.subr.bf16.mxu0 0
    %636 = vmatpush1.bf16.msra.mxu0 %v503
    %637 = vmatprep.subr.bf16.mxu0 0
    %638 = vmatpush1.bf16.msra.mxu0 %v504
    %639 = vmatprep.subr.bf16.mxu0 0
    %640 = vmatpush1.bf16.msra.mxu0 %v505
    %641 = vmatprep.subr.bf16.mxu0 0
    %642 = vmatpush1.bf16.msra.mxu0 %v506
    %643 = vmatprep.subr.bf16.mxu0 0
    %644 = vmatpush1.bf16.msra.mxu0 %v507
    %645 = vmatprep.subr.bf16.mxu0 0
    %646 = vmatpush1.bf16.msra.mxu0 %v508
    %647 = vmatprep.subr.bf16.mxu0 0
    %648 = vmatpush1.bf16.msra.mxu0 %v509
    %649 = vmatprep.subr.bf16.mxu0 0
    %650 = vmatpush1.bf16.msra.mxu0 %v510
    %651 = vmatprep.subr.bf16.mxu0 0
    %652 = vmatpush1.bf16.msra.mxu0 %v511
    %653 = vmatprep.subr.bf16.mxu0 0
    %654 = vmatpush1.bf16.msra.mxu0 %v512
    %655 = vmatprep.subr.bf16.mxu0 0
    %656 = vmatpush1.bf16.msra.mxu0 %v513
    %657 = vmatprep.subr.bf16.mxu0 0
    %658 = vmatpush1.bf16.msra.mxu0 %v514
    %659 = vmatprep.mubr.bf16.mxu0 %v101
    %660 = vmatmul.mubr.bf16.gmra.mrb[0].mxu0 %v100
    %v661 = vpop.f32.mrb[0].mxu0
    %v662 = vadd.f32 %v241, %v661
    %v663 = vpop.f32.mrb[0].mxu0
    %v664 = vpop.f32.mrb[0].mxu0
    %v665 = vpop.f32.mrb[0].mxu0
    %666 = vdwg.mxu0
    %667 = vmatprep.subr.bf16.mxu0 0
    %668 = vmatpush1.bf16.msra.mxu0 %v515
    %669 = vmatprep.subr.bf16.mxu0 0
    %670 = vmatpush1.bf16.msra.mxu0 %v516
    %671 = vmatprep.subr.bf16.mxu0 0
    %672 = vmatpush1.bf16.msra.mxu0 %v517
    %673 = vmatprep.subr.bf16.mxu0 0
    %674 = vmatpush1.bf16.msra.mxu0 %v518
    %675 = vmatprep.subr.bf16.mxu0 0
    %676 = vmatpush1.bf16.msra.mxu0 %v519
    %677 = vmatprep.subr.bf16.mxu0 0
    %678 = vmatpush1.bf16.msra.mxu0 %v520
    %679 = vmatprep.subr.bf16.mxu0 0
    %680 = vmatpush1.bf16.msra.mxu0 %v521
    %681 = vmatprep.subr.bf16.mxu0 0
    %682 = vmatpush1.bf16.msra.mxu0 %v522
    %683 = vmatprep.subr.bf16.mxu0 0
    %684 = vmatpush1.bf16.msra.mxu0 %v523
    %685 = vmatprep.subr.bf16.mxu0 0
    %686 = vmatpush1.bf16.msra.mxu0 %v524
    %687 = vmatprep.subr.bf16.mxu0 0
    %688 = vmatpush1.bf16.msra.mxu0 %v525
    %689 = vmatprep.subr.bf16.mxu0 0
    %690 = vmatpush1.bf16.msra.mxu0 %v526
    %691 = vmatprep.subr.bf16.mxu0 0
    %692 = vmatpush1.bf16.msra.mxu0 %v527
    %693 = vmatprep.subr.bf16.mxu0 0
    %694 = vmatpush1.bf16.msra.mxu0 %v528
    %695 = vmatprep.subr.bf16.mxu0 0
    %696 = vmatpush1.bf16.msra.mxu0 %v529
    %697 = vmatprep.subr.bf16.mxu0 0
    %698 = vmatpush1.bf16.msra.mxu0 %v530
    %699 = vmatprep.mubr.bf16.mxu0 %v103
    %700 = vmatmul.mubr.bf16.gmra.mrb[0].mxu0 %v102
    %v701 = vpop.f32.mrb[0].mxu0
    %v702 = vadd.f32 %v662, %v701
    %v703 = vpop.f32.mrb[0].mxu0
    %v704 = vpop.f32.mrb[0].mxu0
    %v705 = vpop.f32.mrb[0].mxu0
    %706 = vdwg.mxu0
    %707 = vmatprep.subr.bf16.mxu0 0
    %708 = vmatpush1.bf16.msra.mxu0 %v531
    %709 = vmatprep.subr.bf16.mxu0 0
    %710 = vmatpush1.bf16.msra.mxu0 %v532
    %711 = vmatprep.subr.bf16.mxu0 0
    %712 = vmatpush1.bf16.msra.mxu0 %v533
    %713 = vmatprep.subr.bf16.mxu0 0
    %714 = vmatpush1.bf16.msra.mxu0 %v534
    %715 = vmatprep.subr.bf16.mxu0 0
    %716 = vmatpush1.bf16.msra.mxu0 %v535
    %717 = vmatprep.subr.bf16.mxu0 0
    %718 = vmatpush1.bf16.msra.mxu0 %v536
    %719 = vmatprep.subr.bf16.mxu0 0
    %720 = vmatpush1.bf16.msra.mxu0 %v537
    %721 = vmatprep.subr.bf16.mxu0 0
    %722 = vmatpush1.bf16.msra.mxu0 %v538
    %723 = vmatprep.subr.bf16.mxu0 0
    %724 = vmatpush1.bf16.msra.mxu0 %v539
    %725 = vmatprep.subr.bf16.mxu0 0
    %726 = vmatpush1.bf16.msra.mxu0 %v540
    %727 = vmatprep.subr.bf16.mxu0 0
    %728 = vmatpush1.bf16.msra.mxu0 %v541
    %729 = vmatprep.subr.bf16.mxu0 0
    %730 = vmatpush1.bf16.msra.mxu0 %v542
    %731 = vmatprep.subr.bf16.mxu0 0
    %732 = vmatpush1.bf16.msra.mxu0 %v543
    %733 = vmatprep.subr.bf16.mxu0 0
    %734 = vmatpush1.bf16.msra.mxu0 %v544
    %735 = vmatprep.subr.bf16.mxu0 0
    %736 = vmatpush1.bf16.msra.mxu0 %v545
    %737 = vmatprep.subr.bf16.mxu0 0
    %738 = vmatpush1.bf16.msra.mxu0 %v546
    %739 = vmatprep.mubr.bf16.mxu0 %v105
    %740 = vmatmul.mubr.bf16.gmra.mrb[0].mxu0 %v104
    %v741 = vpop.f32.mrb[0].mxu0
    %v742 = vadd.f32 %v702, %v741
    %v743 = vpop.f32.mrb[0].mxu0
    %v744 = vpop.f32.mrb[0].mxu0
    %v745 = vpop.f32.mrb[0].mxu0
    %746 = vdwg.mxu0
    %747 = vmatprep.subr.bf16.mxu0 0
    %748 = vmatpush1.bf16.msra.mxu0 %v547
    %749 = vmatprep.subr.bf16.mxu0 0
    %750 = vmatpush1.bf16.msra.mxu0 %v548
    %751 = vmatprep.subr.bf16.mxu0 0
    %752 = vmatpush1.bf16.msra.mxu0 %v549
    %753 = vmatprep.subr.bf16.mxu0 0
    %754 = vmatpush1.bf16.msra.mxu0 %v550
    %755 = vmatprep.subr.bf16.mxu0 0
    %756 = vmatpush1.bf16.msra.mxu0 %v551
    %757 = vmatprep.subr.bf16.mxu0 0
    %758 = vmatpush1.bf16.msra.mxu0 %v552
    %759 = vmatprep.subr.bf16.mxu0 0
    %760 = vmatpush1.bf16.msra.mxu0 %v553
    %761 = vmatprep.subr.bf16.mxu0 0
    %762 = vmatpush1.bf16.msra.mxu0 %v554
    %763 = vmatprep.subr.bf16.mxu0 0
    %764 = vmatpush1.bf16.msra.mxu0 %v555
    %765 = vmatprep.subr.bf16.mxu0 0
    %766 = vmatpush1.bf16.msra.mxu0 %v556
    %767 = vmatprep.subr.bf16.mxu0 0
    %768 = vmatpush1.bf16.msra.mxu0 %v557
    %769 = vmatprep.subr.bf16.mxu0 0
    %770 = vmatpush1.bf16.msra.mxu0 %v558
    %771 = vmatprep.subr.bf16.mxu0 0
    %772 = vmatpush1.bf16.msra.mxu0 %v559
    %773 = vmatprep.subr.bf16.mxu0 0
    %774 = vmatpush1.bf16.msra.mxu0 %v560
    %775 = vmatprep.subr.bf16.mxu0 0
    %776 = vmatpush1.bf16.msra.mxu0 %v561
    %777 = vmatprep.subr.bf16.mxu0 0
    %778 = vmatpush1.bf16.msra.mxu0 %v562
    %779 = vmatprep.mubr.bf16.mxu0 %v107
    %780 = vmatmul.mubr.bf16.gmra.mrb[0].mxu0 %v106
    %v781 = vpop.f32.mrb[0].mxu0
    %v782 = vadd.f32 %v742, %v781
    %v783 = vpop.f32.mrb[0].mxu0
    %v784 = vpop.f32.mrb[0].mxu0
    %v785 = vpop.f32.mrb[0].mxu0
    %786 = vdwg.mxu0
    %v787 = vmax.f32 %v782, 0.0
    %v788 = vpack.c.bf16 %v787, %v787
    %v789 = vld [vmem:[%s3] sm:$0xf]
    %v790 = vld [vmem:[%s3 + $0x4] sm:$0xf]
    %v791 = vld [vmem:[%s3 + $0x8] sm:$0xf]
    %v792 = vld [vmem:[%s3 + $0xc] sm:$0xf]
    %v793 = vld [vmem:[%s3 + $0x10] sm:$0xf]
    %v794 = vld [vmem:[%s3 + $0x14] sm:$0xf]
    %v795 = vld [vmem:[%s3 + $0x18] sm:$0xf]
    %v796 = vld [vmem:[%s3 + $0x1c] sm:$0xf]
    %v797 = vld [vmem:[%s3 + $0x20] sm:$0xf]
    %v798 = vld [vmem:[%s3 + $0x24] sm:$0xf]
    %v799 = vld [vmem:[%s3 + $0x28] sm:$0xf]
    %v800 = vld [vmem:[%s3 + $0x2c] sm:$0xf]
    %v801 = vld [vmem:[%s3 + $0x30] sm:$0xf]
    %v802 = vld [vmem:[%s3 + $0x34] sm:$0xf]
    %v803 = vld [vmem:[%s3 + $0x38] sm:$0xf]
    %v804 = vld [vmem:[%s3 + $0x3c] sm:$0xf]
    %v805 = vld [vmem:[%s4] sm:$0x1]
    %v807 = vlaneseq
    %v808 = vshrl.u32 %v807, 7
    %v809 = vsub.s32 0, %v808
    %v810 = vrot.slane %v805, %v809
    %v828 = vunpack.c.l.b16 %v789
    %v829 = vunpack.c.l.b16 %v790
    %v830 = vunpack.c.l.b16 %v791
    %v831 = vunpack.c.l.b16 %v792
    %v832 = vunpack.c.l.b16 %v793
    %v833 = vunpack.c.l.b16 %v794
    %v834 = vunpack.c.l.b16 %v795
    %v835 = vunpack.c.l.b16 %v796
    %v836 = vunpack.c.l.b16 %v797
    %v837 = vunpack.c.l.b16 %v798
    %v838 = vunpack.c.l.b16 %v799
    %v839 = vunpack.c.l.b16 %v800
    %v840 = vunpack.c.l.b16 %v801
    %v841 = vunpack.c.l.b16 %v802
    %v842 = vunpack.c.l.b16 %v803
    %v843 = vunpack.c.l.b16 %v804
    %v844 = vpack.c.b16 %v829, %v828
    %v845 = vpack.c.b16 %v831, %v830
    %v846 = vpack.c.b16 %v833, %v832
    %v847 = vpack.c.b16 %v835, %v834
    %v848 = vpack.c.b16 %v837, %v836
    %v849 = vpack.c.b16 %v839, %v838
    %v850 = vpack.c.b16 %v841, %v840
    %v851 = vpack.c.b16 %v843, %v842
    %860 = vmatprep.subr.bf16.mxu0 0
    %861 = vmatpush1.bf16.msra.mxu0 %v844
    %862 = vmatprep.subr.bf16.mxu0 0
    %863 = vmatpush1.bf16.msra.mxu0 %v845
    %864 = vmatprep.subr.bf16.mxu0 0
    %865 = vmatpush1.bf16.msra.mxu0 %v846
    %866 = vmatprep.subr.bf16.mxu0 0
    %867 = vmatpush1.bf16.msra.mxu0 %v847
    %868 = vmatprep.subr.bf16.mxu0 0
    %869 = vmatpush1.bf16.msra.mxu0 %v848
    %870 = vmatprep.subr.bf16.mxu0 0
    %871 = vmatpush1.bf16.msra.mxu0 %v849
    %872 = vmatprep.subr.bf16.mxu0 0
    %873 = vmatpush1.bf16.msra.mxu0 %v850
    %874 = vmatprep.subr.bf16.mxu0 0
    %875 = vmatpush1.bf16.msra.mxu0 %v851
    %876 = vmatprep.subr.bf16.mxu0 0
    %877 = vmatpush1.bf16.msra.mxu0 0
    %878 = vmatprep.subr.bf16.mxu0 0
    %879 = vmatpush1.bf16.msra.mxu0 0
    %880 = vmatprep.subr.bf16.mxu0 0
    %881 = vmatpush1.bf16.msra.mxu0 0
    %882 = vmatprep.subr.bf16.mxu0 0
    %883 = vmatpush1.bf16.msra.mxu0 0
    %884 = vmatprep.subr.bf16.mxu0 0
    %885 = vmatpush1.bf16.msra.mxu0 0
    %886 = vmatprep.subr.bf16.mxu0 0
    %887 = vmatpush1.bf16.msra.mxu0 0
    %888 = vmatprep.subr.bf16.mxu0 0
    %889 = vmatpush1.bf16.msra.mxu0 0
    %890 = vmatprep.subr.bf16.mxu0 0
    %891 = vmatpush1.bf16.msra.mxu0 0
    %892 = vmatprep.mubr.bf16.mxu0 0
    %893 = vmatmul.mubr.bf16.gmra.mrb[0].mxu0 %v788
    %v894 = vpop.f32.mrb[0].mxu0
    %v895 = vadd.f32 %v810, %v894
    %v896 = vpop.f32.mrb[0].mxu0
    %v897 = vpop.f32.mrb[0].mxu0
    %v898 = vpop.f32.mrb[0].mxu0
    %899 = vdwg.mxu0
    %v900 = vmax.f32 %v895, 0.0
    %v901 = vpack.c.bf16 %v900, %v900
    %v902 = vld [vmem:[%s5] sm:$0xf]
    %v903 = vld [vmem:[%s5 + $0x4] sm:$0xf]
    %v904 = vld [vmem:[%s5 + $0x8] sm:$0xf]
    %v905 = vld [vmem:[%s5 + $0xc] sm:$0xf]
    %v906 = vld [vmem:[%s5 + $0x10] sm:$0xf]
    %v907 = vld [vmem:[%s5 + $0x14] sm:$0xf]
    %v908 = vld [vmem:[%s5 + $0x18] sm:$0xf]
    %v909 = vld [vmem:[%s5 + $0x1c] sm:$0xf]
    %v910 = vld [vmem:[%s5 + $0x20] sm:$0xf]
    %v911 = vld [vmem:[%s5 + $0x24] sm:$0xf]
    %v912 = vld [vmem:[%s5 + $0x28] sm:$0xf]
    %v913 = vld [vmem:[%s5 + $0x2c] sm:$0xf]
    %v914 = vld [vmem:[%s5 + $0x30] sm:$0xf]
    %v915 = vld [vmem:[%s5 + $0x34] sm:$0xf]
    %v916 = vld [vmem:[%s5 + $0x38] sm:$0xf]
    %v917 = vld [vmem:[%s5 + $0x3c] sm:$0xf]
    %v918 = vld [vmem:[%s6] sm:$0x1]
    %v920 = vlaneseq
    %v921 = vshrl.u32 %v920, 7
    %v922 = vsub.s32 0, %v921
    %v923 = vrot.slane %v918, %v922
    %v941 = vunpack.c.l.b16 %v902
    %v942 = vunpack.c.l.b16 %v903
    %v943 = vunpack.c.l.b16 %v904
    %v944 = vunpack.c.l.b16 %v905
    %v945 = vunpack.c.l.b16 %v906
    %v946 = vunpack.c.l.b16 %v907
    %v947 = vunpack.c.l.b16 %v908
    %v948 = vunpack.c.l.b16 %v909
    %v949 = vunpack.c.l.b16 %v910
    %v950 = vunpack.c.l.b16 %v911
    %v951 = vunpack.c.l.b16 %v912
    %v952 = vunpack.c.l.b16 %v913
    %v953 = vunpack.c.l.b16 %v914
    %v954 = vunpack.c.l.b16 %v915
    %v955 = vunpack.c.l.b16 %v916
    %v956 = vunpack.c.l.b16 %v917
    %v957 = vpack.c.b16 %v942, %v941
    %v958 = vpack.c.b16 %v944, %v943
    %v959 = vpack.c.b16 %v946, %v945
    %v960 = vpack.c.b16 %v948, %v947
    %v961 = vpack.c.b16 %v950, %v949
    %v962 = vpack.c.b16 %v952, %v951
    %v963 = vpack.c.b16 %v954, %v953
    %v964 = vpack.c.b16 %v956, %v955
    %973 = vmatprep.subr.bf16.mxu0 0
    %974 = vmatpush1.bf16.msra.mxu0 %v957
    %975 = vmatprep.subr.bf16.mxu0 0
    %976 = vmatpush1.bf16.msra.mxu0 %v958
    %977 = vmatprep.subr.bf16.mxu0 0
    %978 = vmatpush1.bf16.msra.mxu0 %v959
    %979 = vmatprep.subr.bf16.mxu0 0
    %980 = vmatpush1.bf16.msra.mxu0 %v960
    %981 = vmatprep.subr.bf16.mxu0 0
    %982 = vmatpush1.bf16.msra.mxu0 %v961
    %983 = vmatprep.subr.bf16.mxu0 0
    %984 = vmatpush1.bf16.msra.mxu0 %v962
    %985 = vmatprep.subr.bf16.mxu0 0
    %986 = vmatpush1.bf16.msra.mxu0 %v963
    %987 = vmatprep.subr.bf16.mxu0 0
    %988 = vmatpush1.bf16.msra.mxu0 %v964
    %989 = vmatprep.subr.bf16.mxu0 0
    %990 = vmatpush1.bf16.msra.mxu0 0
    %991 = vmatprep.subr.bf16.mxu0 0
    %992 = vmatpush1.bf16.msra.mxu0 0
    %993 = vmatprep.subr.bf16.mxu0 0
    %994 = vmatpush1.bf16.msra.mxu0 0
    %995 = vmatprep.subr.bf16.mxu0 0
    %996 = vmatpush1.bf16.msra.mxu0 0
    %997 = vmatprep.subr.bf16.mxu0 0
    %998 = vmatpush1.bf16.msra.mxu0 0
    %999 = vmatprep.subr.bf16.mxu0 0
    %1000 = vmatpush1.bf16.msra.mxu0 0
    %1001 = vmatprep.subr.bf16.mxu0 0
    %1002 = vmatpush1.bf16.msra.mxu0 0
    %1003 = vmatprep.subr.bf16.mxu0 0
    %1004 = vmatpush1.bf16.msra.mxu0 0
    %1005 = vmatprep.mubr.bf16.mxu0 0
    %1006 = vmatmul.mubr.bf16.gmra.mrb[0].mxu0 %v901
    %v1007 = vpop.f32.mrb[0].mxu0
    %v1008 = vadd.f32 %v923, %v1007
    %v1009 = vpop.f32.mrb[0].mxu0
    %v1010 = vpop.f32.mrb[0].mxu0
    %v1011 = vpop.f32.mrb[0].mxu0
    %1012 = vdwg.mxu0
    %vm1013 = vcmask 58368
    %1014 = vst.msk [vmem:[#allocation7] sm:$0x3] %vm1013, %v1008
    // Predicated region
    $region38: #{tpu_custom_call.1} parent=1 // pred_check
      _
    $region39: #{tpu_custom_call.1} parent=1 // pred_check_branch
      %1016 = sbr.rel (0) target = $region41
    $region40: #{tpu_custom_call.1} parent=1 // pred_region
      %s1018 = ssub.s32 32, 32
      %1019 = vsyncadd [#allocation4], %s1018
      %s1021 = sshll.u32 [#allocation7], 4
      %s1022 = int_to_ptr.vmem [resolvable:$true] %s1021
      %1024 = dma.vmem_to_hbm [thread:$0]  %s1022, 32, %s7, [#allocation4]
    $region41: #{tpu_custom_call.1} parent=1 // pred_fallthru
      _
    // Predicated region
    $region42: #{tpu_custom_call.1} parent=1 // pred_check
      _
    $region43: #{tpu_custom_call.1} parent=1 // pred_check_branch
      %1026 = sbr.rel (0) target = $region45
    $region44: #{tpu_custom_call.1} parent=1 // pred_region
      %1027 = dma.done [#allocation4], 32
    $region45: #{tpu_custom_call.1} parent=1 // pred_fallthru
      _
    %1028 = vsyncpa [#allocation3], 1
    %1029 = vsyncpa [#allocation6], 1
    %1030 = vsyncpa [#allocation4], 1

</llo_original>
